<compile_context>
chip_gen: v5e
topology: v5e:2x2
jax: 0.10.0
libtpu: 0.0.40
codegen_flags: <defaults>
</compile_context>

<pallas_src>
import functools

import jax
import jax.numpy as jnp
import numpy as np
from jax.experimental import pallas as pl
from jax.experimental.pallas import tpu as pltpu


# ----------------------------------------------------------------------------
# Compiler params (generation-aware VMEM limit + megacore parallelism)
# ----------------------------------------------------------------------------
def _vmem_limit_bytes():
    try:
        cap = int(pltpu.get_tpu_info().vmem_capacity_bytes)
    except Exception:
        cap = 64 * 1024 * 1024  # conservative fallback (v7x: 64 MiB / TC)
    return int(min(cap * 3 // 4, 96 * 1024 * 1024))


_VMEM_LIMIT = _vmem_limit_bytes()


def _cparams(dimension_semantics):
    return pltpu.CompilerParams(
        dimension_semantics=dimension_semantics,
        vmem_limit_bytes=_VMEM_LIMIT,
    )


# ----------------------------------------------------------------------------
# Fused matmul (+folded-BN bias +optional residual +ReLU) kernel
# (used for conv1 7x7/s2, all stride-2 convs, 1x1 downsamples, and every
#  3x3/s1 conv whose spatial map is tiny enough to batch into one matmul)
# ----------------------------------------------------------------------------
def _pick_mm_tile(m, k, n, extra_row_bytes=0):
    """Largest row tile whose double-buffered working set fits the VMEM budget.

    Review fix: never fall back to a full-M tile that could exceed the budget
    (v7x 64 MiB).  Ragged tails are handled with a cdiv grid instead."""
    if m <= 8:
        return m
    budget = _VMEM_LIMIT // 2
    fixed = 2 * k * n * 2 + 8 * n * 4                    # dbl-buffered bf16 W + bias
    per_row = 2 * (k * 2 + n * 2 + extra_row_bytes)      # dbl-buffered A + out (+id)
    cands = [t for t in (1024, 512, 256, 128, 64, 32, 16, 8) if t <= m]
    for t in cands:                                      # prefer exact divisors
        if m % t == 0 and fixed + t * per_row <= budget:
            return t
    for t in cands:                                      # ragged tail via cdiv grid
        if fixed + t * per_row <= budget:
            return t
    return 8


def _mm_bias_kernel(a_ref, w_ref, b_ref, *refs, relu, has_id):
    if has_id:
        id_ref, o_ref = refs
    else:
        (o_ref,) = refs
    acc = jnp.dot(a_ref[...], w_ref[...], preferred_element_type=jnp.float32)
    acc = acc + b_ref[...]
    if has_id:
        acc = acc + id_ref[...].astype(jnp.float32)
    if relu:
        acc = jnp.maximum(acc, 0.0)
    o_ref[...] = acc.astype(o_ref.dtype)


def matmul_bias(a, w, b, relu, identity=None, out_dtype=jnp.bfloat16):
    """[M,K]@[K,N] + b[N] (+identity[M,N]) (+ReLU). bf16 operands, f32 accumulation."""
    m, k = a.shape
    _, n = w.shape
    has_id = identity is not None
    tm = _pick_mm_tile(m, k, n, extra_row_bytes=(2 * n if has_id else 0))
    in_specs = [
        pl.BlockSpec((tm, k), lambda i: (i, 0)),
        pl.BlockSpec((k, n), lambda i: (0, 0)),
        pl.BlockSpec((1, n), lambda i: (0, 0)),
    ]
    args = [a, w, b.reshape(1, n)]
    if has_id:
        in_specs.append(pl.BlockSpec((tm, n), lambda i: (i, 0)))
        args.append(identity)
    return pl.pallas_call(
        functools.partial(_mm_bias_kernel, relu=relu, has_id=has_id),
        out_shape=jax.ShapeDtypeStruct((m, n), out_dtype),
        grid=(pl.cdiv(m, tm),),
        in_specs=in_specs,
        out_specs=pl.BlockSpec((tm, n), lambda i: (i, 0)),
        compiler_params=_cparams(("parallel",)),
    )(*args)


# ----------------------------------------------------------------------------
# Direct 3x3 / stride-1 conv kernel: one MXU dot per tap over a (th*wo, Cin)
# slab, optional fused residual add + ReLU.  Used when the spatial map is big
# enough (h*w > 16) that the per-image grid is worthwhile.
# ----------------------------------------------------------------------------
def _conv3x3_kernel(x_ref, w_ref, b_ref, *refs, th, wo, relu, has_id):
    # x_ref: (1, Hp, Wp, Cin)  whole padded image for this batch element
    # w_ref: (9, Cin, Cout)    folded-BN weights, tap index kh*3 + kw
    # b_ref: (1, Cout) f32     folded-BN bias
    # id_ref (optional): (1, th, wo, Cout) residual branch
    # o_ref: (1, th, wo, Cout)
    if has_id:
        id_ref, o_ref = refs
    else:
        (o_ref,) = refs
    cin = x_ref.shape[-1]
    cout = o_ref.shape[-1]
    r0 = pl.multiple_of(pl.program_id(1) * th, th)
    acc = None
    for kh in range(3):
        for kw in range(3):
            slab = x_ref[0, pl.ds(r0 + kh, th), pl.ds(kw, wo), :]      # (th, wo, cin)
            d = jnp.dot(slab.reshape(th * wo, cin), w_ref[kh * 3 + kw],
                        preferred_element_type=jnp.float32)            # (th*wo, cout)
            acc = d if acc is None else acc + d
    acc = acc + b_ref[...]
    if has_id:
        acc = acc + id_ref[0].reshape(th * wo, cout).astype(jnp.float32)
    if relu:
        acc = jnp.maximum(acc, 0.0)
    o_ref[0] = acc.reshape(th, wo, cout).astype(o_ref.dtype)


def _row_tile(h, wo, cout):
    """Largest divisor of h that keeps the f32 accumulator tile modest (<=1 MiB)."""
    best = 1
    for t in range(1, h + 1):
        if h % t == 0 and t * wo * cout * 4 <= (1 << 20):
            best = t
    return best


def conv3x3_s1(x, wm, shift, identity=None, relu=True):
    """3x3 / stride-1 / pad-1 conv + folded BN (+fused residual add, +ReLU)."""
    n, h, w, cin = x.shape
    cout = wm.shape[-1]
    # TODO(synk): padding still round-trips HBM once; an in-kernel zero-initialized
    # VMEM scratch would remove it at the cost of unaligned sublane window stores.
    xp = jnp.pad(x, ((0, 0), (1, 1), (1, 1), (0, 0)))          # zero pad, bf16
    w9 = wm.reshape(9, cin, cout)
    th = _row_tile(h, w, cout)
    has_id = identity is not None

    in_specs = [
        pl.BlockSpec((1, h + 2, w + 2, cin), lambda nb, i: (nb, 0, 0, 0)),
        pl.BlockSpec((9, cin, cout), lambda nb, i: (0, 0, 0)),
        pl.BlockSpec((1, cout), lambda nb, i: (0, 0)),
    ]
    args = [xp, w9, shift.reshape(1, cout)]
    if has_id:
        in_specs.append(pl.BlockSpec((1, th, w, cout), lambda nb, i: (nb, i, 0, 0)))
        args.append(identity)

    return pl.pallas_call(
        functools.partial(_conv3x3_kernel, th=th, wo=w, relu=relu, has_id=has_id),
        out_shape=jax.ShapeDtypeStruct((n, h, w, cout), jnp.bfloat16),
        grid=(n, h // th),
        in_specs=in_specs,
        out_specs=pl.BlockSpec((1, th, w, cout), lambda nb, i: (nb, i, 0, 0)),
        compiler_params=_cparams(("parallel", "parallel")),
    )(*args)


# ----------------------------------------------------------------------------
# im2col + matmul path (conv1 7x7/s2, stride-2 convs, 1x1 downsamples, and
# tiny-spatial 3x3/s1 convs batched over n*h*w rows)
# ----------------------------------------------------------------------------
def _im2col(x, ksize, stride, pad):
    n, h, w, c = x.shape
    xp = jnp.pad(x, ((0, 0), (pad, pad), (pad, pad), (0, 0)))
    ho = (h + 2 * pad - ksize) // stride + 1
    wo = (w + 2 * pad - ksize) // stride + 1
    cols = []
    for i in range(ksize):
        for j in range(ksize):
            cols.append(xp[:, i:i + stride * ho:stride, j:j + stride * wo:stride, :])
    patches = jnp.concatenate(cols, axis=-1)   # channel order (kh, kw, cin)
    return patches.reshape(n * ho * wo, ksize * ksize * c), ho, wo


def _conv_bn(x, wm_shift, ksize, stride, pad, relu, identity=None):
    wm, shift = wm_shift
    n, h, w, _ = x.shape
    cout = wm.shape[-1]
    if ksize == 3 and stride == 1 and pad == 1 and h * w > 16:
        return conv3x3_s1(x, wm, shift, identity=identity, relu=relu)
    patches, ho, wo = _im2col(x, ksize, stride, pad)
    ident2d = None
    if identity is not None:
        ident2d = identity.reshape(n * ho * wo, cout)
    out = matmul_bias(patches, wm, shift, relu, identity=ident2d)
    return out.reshape(n, ho, wo, cout)


# ----------------------------------------------------------------------------
# Max-pool 3x3 / s2 / p1 — windowing done inside the kernel (no 9 HBM slabs)
# ----------------------------------------------------------------------------
def _maxpool_kernel(xe_ref, xo_ref, o_ref, *, ho, wo):
    # xe_ref / xo_ref: (1, Hp, wo+1, C)  even / odd padded columns
    # window(oi, k) = rows 2oi..2oi+2 of cols {even[k], odd[k], even[k+1]}
    for oi in range(ho):
        e0 = xe_ref[0, 2 * oi]
        e1 = xe_ref[0, 2 * oi + 1]
        e2 = xe_ref[0, 2 * oi + 2]
        o0 = xo_ref[0, 2 * oi]
        o1 = xo_ref[0, 2 * oi + 1]
        o2 = xo_ref[0, 2 * oi + 2]
        em = jnp.maximum(jnp.maximum(e0, e1), e2)          # (wo+1, C)
        om = jnp.maximum(jnp.maximum(o0, o1), o2)          # (wo+1, C)
        row = jnp.maximum(jnp.maximum(em[:wo], om[:wo]), em[1:wo + 1])
        o_ref[0, oi] = row


def _maxpool_3x3_s2_p1(x):
    n, h, w, c = x.shape
    ho = (h + 2 - 3) // 2 + 1
    wo = (w + 2 - 3) // 2 + 1
    xp = jnp.pad(x, ((0, 0), (1, 1), (1, 1), (0, 0)), constant_values=-jnp.inf)
    xe = xp[:, :, 0::2, :]          # (n, h+2, wo+1, c)
    xo = xp[:, :, 1::2, :]          # (n, h+2, wo+1, c)
    we = xe.shape[2]
    return pl.pallas_call(
        functools.partial(_maxpool_kernel, ho=ho, wo=wo),
        out_shape=jax.ShapeDtypeStruct((n, ho, wo, c), x.dtype),
        grid=(n,),
        in_specs=[
            pl.BlockSpec((1, h + 2, we, c), lambda nb: (nb, 0, 0, 0)),
            pl.BlockSpec((1, h + 2, xo.shape[2], c), lambda nb: (nb, 0, 0, 0)),
        ],
        out_specs=pl.BlockSpec((1, ho, wo, c), lambda nb: (nb, 0, 0, 0)),
        compiler_params=_cparams(("parallel",)),
    )(xe, xo)


# ----------------------------------------------------------------------------
# Head: global average pool + fc + L2-normalize fused in one kernel
# ----------------------------------------------------------------------------
def _head_kernel(x_ref, w_ref, b_ref, logits_ref, feat_ref):
    x = x_ref[...].astype(jnp.float32)                     # (n, h*w, 512)
    f = jnp.mean(x, axis=1)                                # avgpool(1,1) + squeeze
    logits_ref[...] = (
        jnp.dot(f, w_ref[...], preferred_element_type=jnp.float32) + b_ref[...]
    )
    # F.normalize(dim=1, eps=1e-12): x / max(||x||, eps) == x * rsqrt(max(ssq, eps^2))
    ssq = jnp.sum(f * f, axis=1, keepdims=True)
    feat_ref[...] = f * jax.lax.rsqrt(jnp.maximum(ssq, 1e-24))


def head(x, w, b):
    n, h, wd, c = x.shape
    hw = h * wd
    nc = w.shape[1]
    x3 = x.reshape(n, hw, c)
    return pl.pallas_call(
        _head_kernel,
        out_shape=(
            jax.ShapeDtypeStruct((n, nc), jnp.float32),
            jax.ShapeDtypeStruct((n, c), jnp.float32),
        ),
        grid=(1,),
        in_specs=[
            pl.BlockSpec((n, hw, c), lambda i: (0, 0, 0)),
            pl.BlockSpec((c, nc), lambda i: (0, 0)),
            pl.BlockSpec((1, nc), lambda i: (0, 0)),
        ],
        out_specs=(
            pl.BlockSpec((n, nc), lambda i: (0, 0)),
            pl.BlockSpec((n, c), lambda i: (0, 0)),
        ),
        compiler_params=_cparams(("arbitrary",)),
    )(x3, w, b.reshape(1, nc))


# ----------------------------------------------------------------------------
# Network glue
# ----------------------------------------------------------------------------
def _basic_block(x, p):
    stride = p["stride"]
    out = _conv_bn(x, p["c1"], 3, stride, 1, relu=True)
    if "down" in p:
        identity = _conv_bn(x, p["down"], 1, stride, 0, relu=False)
    else:
        identity = x
    # second conv: conv + BN bias + residual add + ReLU fused into one kernel
    return _conv_bn(out, p["c2"], 3, 1, 1, relu=True, identity=identity)


def resnet18_forward(params, x_nchw):
    # public API is NCHW (PyTorch convention); internally NHWC bf16.
    x = jnp.transpose(x_nchw, (0, 2, 3, 1)).astype(jnp.bfloat16)
    x = _conv_bn(x, params["conv1"], 7, 2, 3, relu=True)
    x = _maxpool_3x3_s2_p1(x)
    for p in params["blocks"]:
        x = _basic_block(x, p)
    logits, feat_norm = head(x, params["fc_w"], params["fc_b"])
    return logits, feat_norm


# ----------------------------------------------------------------------------
# Deterministic parameter construction (synthetic; shapes match torchvision
# resnet18 minus its fc, plus a fresh fc 512 -> num_classes)
# ----------------------------------------------------------------------------
def _conv_bn_params(key, cin, cout, ksize):
    k1, k2, k3, k4, k5 = jax.random.split(key, 5)
    fan_in = cin * ksize * ksize
    w = jax.random.normal(k1, (cout, cin, ksize, ksize), jnp.float32) / np.sqrt(fan_in)
    gamma = 1.0 + 0.1 * jax.random.normal(k2, (cout,), jnp.float32)
    beta = 0.1 * jax.random.normal(k3, (cout,), jnp.float32)
    mean = 0.1 * jax.random.normal(k4, (cout,), jnp.float32)
    var = jax.random.uniform(k5, (cout,), jnp.float32, 0.5, 1.5)
    scale = gamma / jnp.sqrt(var + 1e-5)  # eval-mode BN folded into conv
    shift = beta - mean * scale
    # PyTorch conv weight [Cout,Cin,kh,kw] -> [kh*kw*Cin, Cout], (kh,kw,cin) order
    wm = jnp.transpose(w, (2, 3, 1, 0)).reshape(ksize * ksize * cin, cout)
    wm = (wm * scale[None, :]).astype(jnp.bfloat16)   # bf16 MXU weights
    return wm, shift                                   # shift stays f32


def _basic_block_params(key, cin, cout, stride):
    keys = jax.random.split(key, 3)
    p = {
        "c1": _conv_bn_params(keys[0], cin, cout, 3),
        "c2": _conv_bn_params(keys[1], cout, cout, 3),
        "stride": stride,
    }
    if stride != 1 or cin != cout:
        p["down"] = _conv_bn_params(keys[2], cin, cout, 1)
    return p


def init_resnet18_params(key, num_classes=2):
    keys = jax.random.split(key, 12)
    params = {"conv1": _conv_bn_params(keys[0], 3, 64, 7)}
    layer_cfg = [(64, 64, 1), (64, 128, 2), (128, 256, 2), (256, 512, 2)]
    blocks = []
    ki = 1
    for cin, cout, stride in layer_cfg:
        blocks.append(_basic_block_params(keys[ki], cin, cout, stride)); ki += 1
        blocks.append(_basic_block_params(keys[ki], cout, cout, 1)); ki += 1
    params["blocks"] = blocks
    kfw, kfb = jax.random.split(keys[ki], 2)
    params["fc_w"] = (
        jax.random.normal(kfw, (512, num_classes), jnp.float32) / np.sqrt(512.0)
    )                                                   # f32 fc (precision note)
    params["fc_b"] = 0.01 * jax.random.normal(kfb, (num_classes,), jnp.float32)
    return params


if __name__ == "__main__":
    key = jax.random.PRNGKey(0)
    pkey, xkey = jax.random.split(key)
    params = init_resnet18_params(pkey, num_classes=2)
    # NCHW input, as in PyTorch. 32x32 spatial -> 1x1 feature map before avgpool.
    x = jax.random.normal(xkey, (2, 3, 32, 32), jnp.float32)

    logits, feat = resnet18_forward(params, x)
    jax.block_until_ready((logits, feat))

    assert logits.shape == (2, 2) and feat.shape == (2, 512)
    assert bool(jnp.all(jnp.isfinite(logits))) and bool(jnp.all(jnp.isfinite(feat)))
    print("KERNEL_OK")
</pallas_src>

<mosaic_0001>
module attributes {stable_mosaic.version = 11 : i64} {
  func.func @_mm_bias_kernel(%arg0: i32, %arg1: memref<512x147xbf16, #tpu.memory_space<vmem>>, %arg2: memref<147x64xbf16, #tpu.memory_space<vmem>>, %arg3: memref<1x64xf32, #tpu.memory_space<vmem>>, %arg4: memref<512x64xbf16, #tpu.memory_space<vmem>>) attributes {dimension_semantics = [#tpu.dimension_semantics<parallel>], iteration_bounds = array<i64: 1>, scalar_prefetch = 0 : i64, scratch_operands = 0 : i64, tpu.core_type = #tpu.core_type<tc>, window_params = [{transform_indices = @transform_0, window_bounds = array<i64: 512, 147>}, {pipeline_mode = #tpu.pipeline_mode<synchronous>, transform_indices = @transform_1, window_bounds = array<i64: 147, 64>}, {pipeline_mode = #tpu.pipeline_mode<synchronous>, transform_indices = @transform_2, window_bounds = array<i64: 1, 64>}, {transform_indices = @transform_3, window_bounds = array<i64: 512, 64>}]} {
    %c0 = arith.constant 0 : index
    %c0_0 = arith.constant 0 : index
    %0 = vector.load %arg1[%c0, %c0_0] : memref<512x147xbf16, #tpu.memory_space<vmem>>, vector<512x147xbf16>
    %c0_1 = arith.constant 0 : index
    %c0_2 = arith.constant 0 : index
    %1 = vector.load %arg2[%c0_1, %c0_2] : memref<147x64xbf16, #tpu.memory_space<vmem>>, vector<147x64xbf16>
    %cst = arith.constant dense<0.000000e+00> : vector<512x64xf32>
    %2 = tpu.matmul %0, %1, %cst {dimension_numbers = #tpu.dot_dimension_numbers<[1], [0], [0], [1], [0, 0, 1, 1], [], []>} : vector<512x147xbf16>, vector<147x64xbf16>, vector<512x64xf32> -> vector<512x64xf32>
    %c0_3 = arith.constant 0 : index
    %c0_4 = arith.constant 0 : index
    %3 = vector.load %arg3[%c0_3, %c0_4] : memref<1x64xf32, #tpu.memory_space<vmem>>, vector<1x64xf32>
    %4 = vector.broadcast %3 : vector<1x64xf32> to vector<512x64xf32>
    %5 = arith.addf %2, %4 : vector<512x64xf32>
    %cst_5 = arith.constant 0.000000e+00 : f32
    %6 = vector.broadcast %cst_5 : f32 to vector<512x64xf32>
    %7 = arith.maximumf %5, %6 : vector<512x64xf32>
    %8 = arith.truncf %7 : vector<512x64xf32> to vector<512x64xbf16>
    %c0_6 = arith.constant 0 : index
    %c0_7 = arith.constant 0 : index
    %9 = vector.load %arg4[%c0_6, %c0_7] : memref<512x64xbf16, #tpu.memory_space<vmem>>, vector<512x64xbf16>
    tpu.vector_store %arg4[%c0_6, %c0_7], %8 {strides = array<i32>} : memref<512x64xbf16, #tpu.memory_space<vmem>>, vector<512x64xbf16>,
    return
  }
  func.func @transform_0(%arg0: i32) -> (i32, i32) {
    %c0_i32 = arith.constant 0 : i32
    %c0_i32_0 = arith.constant 0 : i32
    return %arg0, %c0_i32 : i32, i32
  }
  func.func @transform_1(%arg0: i32) -> (i32, i32) {
    %c0_i32 = arith.constant 0 : i32
    %c0_i32_0 = arith.constant 0 : i32
    %c0_i32_1 = arith.constant 0 : i32
    return %c0_i32, %c0_i32_0 : i32, i32
  }
  func.func @transform_2(%arg0: i32) -> (i32, i32) {
    %c0_i32 = arith.constant 0 : i32
    %c0_i32_0 = arith.constant 0 : i32
    %c0_i32_1 = arith.constant 0 : i32
    return %c0_i32, %c0_i32_0 : i32, i32
  }
  func.func @transform_3(%arg0: i32) -> (i32, i32) {
    %c0_i32 = arith.constant 0 : i32
    %c0_i32_0 = arith.constant 0 : i32
    return %arg0, %c0_i32 : i32, i32
  }
}

</mosaic_0001>

<llo_original>
// kernel: tpu_custom_call.1
$region0: #{tpu_custom_call.1}
  #allocation0 [shape = 'u32[]', space=smem, size = 0x4, offset = 0x4, fixed_abs, tag = 'smem constant byte address 0x4 - core index']
  #allocation1 [shape = 'u32[72,128]{1,0:T(1,128)}', space=vmem, size = 0x9000, scoped, tag = 'internal scratch']
  %s0 = inlined_call_operand.vmem [shape: bf16[512,147], index: 0, kind: input, shape index: {}]
  %s1 = inlined_call_operand.vmem [shape: bf16[147,64], index: 1, kind: input, shape index: {}]
  %s2 = inlined_call_operand.vmem [shape: f32[1,64], index: 2, kind: input, shape index: {}]
  %s3 = inlined_call_operand.vmem [shape: bf16[512,64], index: 3, kind: output, shape index: {}]
  %s4 = sld [smem:[#allocation0]]
  $region22: #{tpu_custom_call.1} parent=0
    _
  %s6 = ssub.s32 1, %s4
  %s7 = scalar_select 0, %s6, %s4
  // Predicated region
  $region2: #{tpu_custom_call.1} parent=0 // pred_check
    _
  $region3: #{tpu_custom_call.1} parent=0 // pred_check_branch
    %9 = sbr.rel (0) target = $region5
  $region4: #{tpu_custom_call.1} parent=0 // pred_region
    _
  $region5: #{tpu_custom_call.1} parent=0 // pred_fallthru
    _
  // Predicated region
  $region6: #{tpu_custom_call.1} parent=0 // pred_check
    _
  $region7: #{tpu_custom_call.1} parent=0 // pred_check_branch
    %11 = sbr.rel (0) target = $region9
  $region8: #{tpu_custom_call.1} parent=0 // pred_region
    _
  $region9: #{tpu_custom_call.1} parent=0 // pred_fallthru
    _
  // Predicated region
  $region10: #{tpu_custom_call.1} parent=0 // pred_check
    _
  $region11: #{tpu_custom_call.1} parent=0 // pred_check_branch
    %13 = sbr.rel (0) target = $region13
  $region12: #{tpu_custom_call.1} parent=0 // pred_region
    _
  $region13: #{tpu_custom_call.1} parent=0 // pred_fallthru
    _
  %v15 = vld [vmem:[%s0] sm:$0xff]
  %v16 = vld [vmem:[%s0 + $0x8] sm:$0xff]
  %v17 = vld [vmem:[%s0 + $0x10] sm:$0xff]
  %v18 = vld [vmem:[%s0 + $0x18] sm:$0xff]
  %v19 = vld [vmem:[%s0 + $0x20] sm:$0xff]
  %v20 = vld [vmem:[%s0 + $0x28] sm:$0xff]
  %v21 = vld [vmem:[%s0 + $0x30] sm:$0xff]
  %v22 = vld [vmem:[%s0 + $0x38] sm:$0xff]
  %v23 = vld [vmem:[%s0 + $0x40] sm:$0xff]
  %v24 = vld [vmem:[%s0 + $0x48] sm:$0xff]
  %v25 = vld [vmem:[%s0 + $0x50] sm:$0xff]
  %v26 = vld [vmem:[%s0 + $0x58] sm:$0xff]
  %v27 = vld [vmem:[%s0 + $0x60] sm:$0xff]
  %v28 = vld [vmem:[%s0 + $0x68] sm:$0xff]
  %v29 = vld [vmem:[%s0 + $0x70] sm:$0xff]
  %v30 = vld [vmem:[%s0 + $0x78] sm:$0xff]
  %v31 = vld [vmem:[%s0 + $0x80] sm:$0xff]
  %v32 = vld [vmem:[%s0 + $0x88] sm:$0xff]
  %v33 = vld [vmem:[%s0 + $0x90] sm:$0xff]
  %v34 = vld [vmem:[%s0 + $0x98] sm:$0xff]
  %v35 = vld [vmem:[%s0 + $0xa0] sm:$0xff]
  %v36 = vld [vmem:[%s0 + $0xa8] sm:$0xff]
  %v37 = vld [vmem:[%s0 + $0xb0] sm:$0xff]
  %v38 = vld [vmem:[%s0 + $0xb8] sm:$0xff]
  %v39 = vld [vmem:[%s0 + $0xc0] sm:$0xff]
  %v40 = vld [vmem:[%s0 + $0xc8] sm:$0xff]
  %v41 = vld [vmem:[%s0 + $0xd0] sm:$0xff]
  %v42 = vld [vmem:[%s0 + $0xd8] sm:$0xff]
  %v43 = vld [vmem:[%s0 + $0xe0] sm:$0xff]
  %v44 = vld [vmem:[%s0 + $0xe8] sm:$0xff]
  %v45 = vld [vmem:[%s0 + $0xf0] sm:$0xff]
  %v46 = vld [vmem:[%s0 + $0xf8] sm:$0xff]
  %v47 = vld [vmem:[%s0 + $0x100] sm:$0xff]
  %v48 = vld [vmem:[%s0 + $0x108] sm:$0xff]
  %v49 = vld [vmem:[%s0 + $0x110] sm:$0xff]
  %v50 = vld [vmem:[%s0 + $0x118] sm:$0xff]
  %v51 = vld [vmem:[%s0 + $0x120] sm:$0xff]
  %v52 = vld [vmem:[%s0 + $0x128] sm:$0xff]
  %v53 = vld [vmem:[%s0 + $0x130] sm:$0xff]
  %v54 = vld [vmem:[%s0 + $0x138] sm:$0xff]
  %v55 = vld [vmem:[%s0 + $0x140] sm:$0xff]
  %v56 = vld [vmem:[%s0 + $0x148] sm:$0xff]
  %v57 = vld [vmem:[%s0 + $0x150] sm:$0xff]
  %v58 = vld [vmem:[%s0 + $0x158] sm:$0xff]
  %v59 = vld [vmem:[%s0 + $0x160] sm:$0xff]
  %v60 = vld [vmem:[%s0 + $0x168] sm:$0xff]
  %v61 = vld [vmem:[%s0 + $0x170] sm:$0xff]
  %v62 = vld [vmem:[%s0 + $0x178] sm:$0xff]
  %v63 = vld [vmem:[%s0 + $0x180] sm:$0xff]
  %v64 = vld [vmem:[%s0 + $0x188] sm:$0xff]
  %v65 = vld [vmem:[%s0 + $0x190] sm:$0xff]
  %v66 = vld [vmem:[%s0 + $0x198] sm:$0xff]
  %v67 = vld [vmem:[%s0 + $0x1a0] sm:$0xff]
  %v68 = vld [vmem:[%s0 + $0x1a8] sm:$0xff]
  %v69 = vld [vmem:[%s0 + $0x1b0] sm:$0xff]
  %v70 = vld [vmem:[%s0 + $0x1b8] sm:$0xff]
  %v71 = vld [vmem:[%s0 + $0x1c0] sm:$0xff]
  %v72 = vld [vmem:[%s0 + $0x1c8] sm:$0xff]
  %v73 = vld [vmem:[%s0 + $0x1d0] sm:$0xff]
  %v74 = vld [vmem:[%s0 + $0x1d8] sm:$0xff]
  %v75 = vld [vmem:[%s0 + $0x1e0] sm:$0xff]
  %v76 = vld [vmem:[%s0 + $0x1e8] sm:$0xff]
  %v77 = vld [vmem:[%s0 + $0x1f0] sm:$0xff]
  %v78 = vld [vmem:[%s0 + $0x1f8] sm:$0xff]
  %v79 = vld [vmem:[%s1] sm:$0xf]
  %v80 = vld [vmem:[%s1 + $0x4] sm:$0xf]
  %v81 = vld [vmem:[%s1 + $0x8] sm:$0xf]
  %v82 = vld [vmem:[%s1 + $0xc] sm:$0xf]
  %v83 = vld [vmem:[%s1 + $0x10] sm:$0xf]
  %v84 = vld [vmem:[%s1 + $0x14] sm:$0xf]
  %v85 = vld [vmem:[%s1 + $0x18] sm:$0xf]
  %v86 = vld [vmem:[%s1 + $0x1c] sm:$0xf]
  %v87 = vld [vmem:[%s1 + $0x20] sm:$0xf]
  %v88 = vld [vmem:[%s1 + $0x24] sm:$0xf]
  %v89 = vld [vmem:[%s1 + $0x28] sm:$0xf]
  %v90 = vld [vmem:[%s1 + $0x2c] sm:$0xf]
  %v91 = vld [vmem:[%s1 + $0x30] sm:$0xf]
  %v92 = vld [vmem:[%s1 + $0x34] sm:$0xf]
  %v93 = vld [vmem:[%s1 + $0x38] sm:$0xf]
  %v94 = vld [vmem:[%s1 + $0x3c] sm:$0xf]
  %v95 = vld [vmem:[%s1 + $0x40] sm:$0xf]
  %v96 = vld [vmem:[%s1 + $0x44] sm:$0xf]
  %v97 = vld [vmem:[%s1 + $0x48] sm:$0x3]
  %v98 = vld [vmem:[%s2] sm:$0x1]
  %v100 = vperm.slane %v98, 0
  %v166 = vunpack.c.l.b16 %v15
  %v167 = vunpack.c.h.b16 %v15
  %v168 = vunpack.c.l.b16 %v16
  %v169 = vunpack.c.h.b16 %v16
  %v170 = vunpack.c.l.b16 %v17
  %v171 = vunpack.c.h.b16 %v17
  %v172 = vunpack.c.l.b16 %v18
  %v173 = vunpack.c.h.b16 %v18
  %v174 = vunpack.c.l.b16 %v19
  %v175 = vunpack.c.h.b16 %v19
  %v176 = vunpack.c.l.b16 %v20
  %v177 = vunpack.c.h.b16 %v20
  %v178 = vunpack.c.l.b16 %v21
  %v179 = vunpack.c.h.b16 %v21
  %v180 = vunpack.c.l.b16 %v22
  %v181 = vunpack.c.h.b16 %v22
  %v182 = vunpack.c.l.b16 %v23
  %v183 = vunpack.c.h.b16 %v23
  %v184 = vunpack.c.l.b16 %v24
  %v185 = vunpack.c.h.b16 %v24
  %v186 = vunpack.c.l.b16 %v25
  %v187 = vunpack.c.h.b16 %v25
  %v188 = vunpack.c.l.b16 %v26
  %v189 = vunpack.c.h.b16 %v26
  %v190 = vunpack.c.l.b16 %v27
  %v191 = vunpack.c.h.b16 %v27
  %v192 = vunpack.c.l.b16 %v28
  %v193 = vunpack.c.h.b16 %v28
  %v194 = vunpack.c.l.b16 %v29
  %v195 = vunpack.c.h.b16 %v29
  %v196 = vunpack.c.l.b16 %v30
  %v197 = vunpack.c.h.b16 %v30
  %v198 = vunpack.c.l.b16 %v31
  %v199 = vunpack.c.h.b16 %v31
  %v200 = vunpack.c.l.b16 %v32
  %v201 = vunpack.c.h.b16 %v32
  %v202 = vunpack.c.l.b16 %v33
  %v203 = vunpack.c.h.b16 %v33
  %v204 = vunpack.c.l.b16 %v34
  %v205 = vunpack.c.h.b16 %v34
  %v206 = vunpack.c.l.b16 %v35
  %v207 = vunpack.c.h.b16 %v35
  %v208 = vunpack.c.l.b16 %v36
  %v209 = vunpack.c.h.b16 %v36
  %v210 = vunpack.c.l.b16 %v37
  %v211 = vunpack.c.h.b16 %v37
  %v212 = vunpack.c.l.b16 %v38
  %v213 = vunpack.c.h.b16 %v38
  %v214 = vunpack.c.l.b16 %v39
  %v215 = vunpack.c.h.b16 %v39
  %v216 = vunpack.c.l.b16 %v40
  %v217 = vunpack.c.h.b16 %v40
  %v218 = vunpack.c.l.b16 %v41
  %v219 = vunpack.c.h.b16 %v41
  %v220 = vunpack.c.l.b16 %v42
  %v221 = vunpack.c.h.b16 %v42
  %v222 = vunpack.c.l.b16 %v43
  %v223 = vunpack.c.h.b16 %v43
  %v224 = vunpack.c.l.b16 %v44
  %v225 = vunpack.c.h.b16 %v44
  %v226 = vunpack.c.l.b16 %v45
  %v227 = vunpack.c.h.b16 %v45
  %v228 = vunpack.c.l.b16 %v46
  %v229 = vunpack.c.h.b16 %v46
  %v230 = vunpack.c.l.b16 %v47
  %v231 = vunpack.c.h.b16 %v47
  %v232 = vunpack.c.l.b16 %v48
  %v233 = vunpack.c.h.b16 %v48
  %v234 = vunpack.c.l.b16 %v49
  %v235 = vunpack.c.h.b16 %v49
  %v236 = vunpack.c.l.b16 %v50
  %v237 = vunpack.c.h.b16 %v50
  %v238 = vunpack.c.l.b16 %v51
  %v239 = vunpack.c.h.b16 %v51
  %v240 = vunpack.c.l.b16 %v52
  %v241 = vunpack.c.h.b16 %v52
  %v242 = vunpack.c.l.b16 %v53
  %v243 = vunpack.c.h.b16 %v53
  %v244 = vunpack.c.l.b16 %v54
  %v245 = vunpack.c.h.b16 %v54
  %v246 = vunpack.c.l.b16 %v55
  %v247 = vunpack.c.h.b16 %v55
  %v248 = vunpack.c.l.b16 %v56
  %v249 = vunpack.c.h.b16 %v56
  %v250 = vunpack.c.l.b16 %v57
  %v251 = vunpack.c.h.b16 %v57
  %v252 = vunpack.c.l.b16 %v58
  %v253 = vunpack.c.h.b16 %v58
  %v254 = vunpack.c.l.b16 %v59
  %v255 = vunpack.c.h.b16 %v59
  %v256 = vunpack.c.l.b16 %v60
  %v257 = vunpack.c.h.b16 %v60
  %v258 = vunpack.c.l.b16 %v61
  %v259 = vunpack.c.h.b16 %v61
  %v260 = vunpack.c.l.b16 %v62
  %v261 = vunpack.c.h.b16 %v62
  %v262 = vunpack.c.l.b16 %v63
  %v263 = vunpack.c.h.b16 %v63
  %v264 = vunpack.c.l.b16 %v64
  %v265 = vunpack.c.h.b16 %v64
  %v266 = vunpack.c.l.b16 %v65
  %v267 = vunpack.c.h.b16 %v65
  %v268 = vunpack.c.l.b16 %v66
  %v269 = vunpack.c.h.b16 %v66
  %v270 = vunpack.c.l.b16 %v67
  %v271 = vunpack.c.h.b16 %v67
  %v272 = vunpack.c.l.b16 %v68
  %v273 = vunpack.c.h.b16 %v68
  %v274 = vunpack.c.l.b16 %v69
  %v275 = vunpack.c.h.b16 %v69
  %v276 = vunpack.c.l.b16 %v70
  %v277 = vunpack.c.h.b16 %v70
  %v278 = vunpack.c.l.b16 %v71
  %v279 = vunpack.c.h.b16 %v71
  %v280 = vunpack.c.l.b16 %v72
  %v281 = vunpack.c.h.b16 %v72
  %v282 = vunpack.c.l.b16 %v73
  %v283 = vunpack.c.h.b16 %v73
  %v284 = vunpack.c.l.b16 %v74
  %v285 = vunpack.c.h.b16 %v74
  %v286 = vunpack.c.l.b16 %v75
  %v287 = vunpack.c.h.b16 %v75
  %v288 = vunpack.c.l.b16 %v76
  %v289 = vunpack.c.h.b16 %v76
  %v290 = vunpack.c.l.b16 %v77
  %v291 = vunpack.c.h.b16 %v77
  %v292 = vunpack.c.l.b16 %v78
  %v293 = vunpack.c.h.b16 %v78
  %v294 = vpack.c.b16 %v168, %v166
  %v295 = vpack.c.b16 %v169, %v167
  %v296 = vpack.c.b16 %v172, %v170
  %v297 = vpack.c.b16 %v173, %v171
  %v298 = vpack.c.b16 %v176, %v174
  %v299 = vpack.c.b16 %v177, %v175
  %v300 = vpack.c.b16 %v180, %v178
  %v301 = vpack.c.b16 %v181, %v179
  %v302 = vpack.c.b16 %v184, %v182
  %v303 = vpack.c.b16 %v185, %v183
  %v304 = vpack.c.b16 %v188, %v186
  %v305 = vpack.c.b16 %v189, %v187
  %v306 = vpack.c.b16 %v192, %v190
  %v307 = vpack.c.b16 %v193, %v191
  %v308 = vpack.c.b16 %v196, %v194
  %v309 = vpack.c.b16 %v197, %v195
  %v310 = vpack.c.b16 %v200, %v198
  %v311 = vpack.c.b16 %v201, %v199
  %v312 = vpack.c.b16 %v204, %v202
  %v313 = vpack.c.b16 %v205, %v203
  %v314 = vpack.c.b16 %v208, %v206
  %v315 = vpack.c.b16 %v209, %v207
  %v316 = vpack.c.b16 %v212, %v210
  %v317 = vpack.c.b16 %v213, %v211
  %v318 = vpack.c.b16 %v216, %v214
  %v319 = vpack.c.b16 %v217, %v215
  %v320 = vpack.c.b16 %v220, %v218
  %v321 = vpack.c.b16 %v221, %v219
  %v322 = vpack.c.b16 %v224, %v222
  %v323 = vpack.c.b16 %v225, %v223
  %v324 = vpack.c.b16 %v228, %v226
  %v325 = vpack.c.b16 %v229, %v227
  %v326 = vpack.c.b16 %v232, %v230
  %v327 = vpack.c.b16 %v233, %v231
  %v328 = vpack.c.b16 %v236, %v234
  %v329 = vpack.c.b16 %v237, %v235
  %v330 = vpack.c.b16 %v240, %v238
  %v331 = vpack.c.b16 %v241, %v239
  %v332 = vpack.c.b16 %v244, %v242
  %v333 = vpack.c.b16 %v245, %v243
  %v334 = vpack.c.b16 %v248, %v246
  %v335 = vpack.c.b16 %v249, %v247
  %v336 = vpack.c.b16 %v252, %v250
  %v337 = vpack.c.b16 %v253, %v251
  %v338 = vpack.c.b16 %v256, %v254
  %v339 = vpack.c.b16 %v257, %v255
  %v340 = vpack.c.b16 %v260, %v258
  %v341 = vpack.c.b16 %v261, %v259
  %v342 = vpack.c.b16 %v264, %v262
  %v343 = vpack.c.b16 %v265, %v263
  %v344 = vpack.c.b16 %v268, %v266
  %v345 = vpack.c.b16 %v269, %v267
  %v346 = vpack.c.b16 %v272, %v270
  %v347 = vpack.c.b16 %v273, %v271
  %v348 = vpack.c.b16 %v276, %v274
  %v349 = vpack.c.b16 %v277, %v275
  %v350 = vpack.c.b16 %v280, %v278
  %v351 = vpack.c.b16 %v281, %v279
  %v352 = vpack.c.b16 %v284, %v282
  %v353 = vpack.c.b16 %v285, %v283
  %v354 = vpack.c.b16 %v288, %v286
  %v355 = vpack.c.b16 %v289, %v287
  %v356 = vpack.c.b16 %v292, %v290
  %v357 = vpack.c.b16 %v293, %v291
  %v409 = vunpack.c.l.b16 %v79
  %v410 = vunpack.c.l.b16 %v80
  %v411 = vunpack.c.l.b16 %v81
  %v412 = vunpack.c.l.b16 %v82
  %v413 = vunpack.c.l.b16 %v83
  %v414 = vunpack.c.l.b16 %v84
  %v415 = vunpack.c.l.b16 %v85
  %v416 = vunpack.c.l.b16 %v86
  %v417 = vunpack.c.l.b16 %v87
  %v418 = vunpack.c.l.b16 %v88
  %v419 = vunpack.c.l.b16 %v89
  %v420 = vunpack.c.l.b16 %v90
  %v421 = vunpack.c.l.b16 %v91
  %v422 = vunpack.c.l.b16 %v92
  %v423 = vunpack.c.l.b16 %v93
  %v424 = vunpack.c.l.b16 %v94
  %v425 = vunpack.c.l.b16 %v95
  %v426 = vunpack.c.l.b16 %v96
  %v427 = vunpack.c.l.b16 %v97
  %v428 = vpack.c.b16 %v410, %v409
  %v429 = vpack.c.b16 %v412, %v411
  %v430 = vpack.c.b16 %v414, %v413
  %v431 = vpack.c.b16 %v416, %v415
  %v432 = vpack.c.b16 %v418, %v417
  %v433 = vpack.c.b16 %v420, %v419
  %v434 = vpack.c.b16 %v422, %v421
  %v435 = vpack.c.b16 %v424, %v423
  %v436 = vpack.c.b16 %v426, %v425
  %v437 = vpack.c.b16 %v427, %v427
  %vm447 = vcmask 154624
  %v449 = vsel %vm447, %v295, 0
  %v452 = vsel %vm447, %v297, 0
  %v455 = vsel %vm447, %v299, 0
  %v458 = vsel %vm447, %v301, 0
  %v461 = vsel %vm447, %v303, 0
  %v464 = vsel %vm447, %v305, 0
  %v467 = vsel %vm447, %v307, 0
  %v470 = vsel %vm447, %v309, 0
  %v473 = vsel %vm447, %v311, 0
  %v476 = vsel %vm447, %v313, 0
  %v479 = vsel %vm447, %v315, 0
  %v482 = vsel %vm447, %v317, 0
  %v485 = vsel %vm447, %v319, 0
  %v488 = vsel %vm447, %v321, 0
  %v491 = vsel %vm447, %v323, 0
  %v494 = vsel %vm447, %v325, 0
  %v497 = vsel %vm447, %v327, 0
  %v500 = vsel %vm447, %v329, 0
  %v503 = vsel %vm447, %v331, 0
  %v506 = vsel %vm447, %v333, 0
  %v509 = vsel %vm447, %v335, 0
  %v512 = vsel %vm447, %v337, 0
  %v515 = vsel %vm447, %v339, 0
  %v518 = vsel %vm447, %v341, 0
  %v521 = vsel %vm447, %v343, 0
  %v524 = vsel %vm447, %v345, 0
  %v527 = vsel %vm447, %v347, 0
  %v530 = vsel %vm447, %v349, 0
  %v533 = vsel %vm447, %v351, 0
  %v536 = vsel %vm447, %v353, 0
  %v539 = vsel %vm447, %v355, 0
  %v542 = vsel %vm447, %v357, 0
  %vm544 = vcmask 1040384
  %vm545 = vcmask 1041408
  %v546 = vsel %vm544, 4294967295, 65535
  %v547 = vsel %vm545, %v546, 0
  %v549 = vand.u32 %v437, %v547
  %551 = vmatpush.bf16.msra.mxu0 %v435
  %552 = vmatpush.bf16.msra.mxu0 %v434
  %553 = vmatpush.bf16.msra.mxu0 %v433
  %554 = vmatpush.bf16.msra.mxu0 %v432
  %555 = vmatpush.bf16.msra.mxu0 %v431
  %556 = vmatpush.bf16.msra.mxu0 %v430
  %557 = vmatpush.bf16.msra.mxu0 %v429
  %558 = vmatpush.bf16.msra.mxu0 %v428
  %559 = vmatmul.bf16.gmra.mxu0 %v294
  %v560 = vpop.f32.mrf.mxu0
  %v561 = vadd.f32 %v100, %v560
  %v562 = vpop.f32.mrf.mxu0
  %v563 = vadd.f32 %v100, %v562
  %564 = vmatmul.bf16.gmra.mxu0 %v296
  %v565 = vpop.f32.mrf.mxu0
  %v566 = vadd.f32 %v100, %v565
  %v567 = vpop.f32.mrf.mxu0
  %v568 = vadd.f32 %v100, %v567
  %569 = vmatmul.bf16.gmra.mxu0 %v298
  %v570 = vpop.f32.mrf.mxu0
  %v571 = vadd.f32 %v100, %v570
  %v572 = vpop.f32.mrf.mxu0
  %v573 = vadd.f32 %v100, %v572
  %574 = vmatmul.bf16.gmra.mxu0 %v300
  %v575 = vpop.f32.mrf.mxu0
  %v576 = vadd.f32 %v100, %v575
  %v577 = vpop.f32.mrf.mxu0
  %v578 = vadd.f32 %v100, %v577
  %579 = vmatmul.bf16.gmra.mxu0 %v302
  %v580 = vpop.f32.mrf.mxu0
  %v581 = vadd.f32 %v100, %v580
  %v582 = vpop.f32.mrf.mxu0
  %v583 = vadd.f32 %v100, %v582
  %584 = vmatmul.bf16.gmra.mxu0 %v304
  %v585 = vpop.f32.mrf.mxu0
  %v586 = vadd.f32 %v100, %v585
  %v587 = vpop.f32.mrf.mxu0
  %v588 = vadd.f32 %v100, %v587
  %589 = vmatmul.bf16.gmra.mxu0 %v306
  %v590 = vpop.f32.mrf.mxu0
  %v591 = vadd.f32 %v100, %v590
  %v592 = vpop.f32.mrf.mxu0
  %v593 = vadd.f32 %v100, %v592
  %594 = vmatmul.bf16.gmra.mxu0 %v308
  %v595 = vpop.f32.mrf.mxu0
  %v596 = vadd.f32 %v100, %v595
  %v597 = vpop.f32.mrf.mxu0
  %v598 = vadd.f32 %v100, %v597
  %599 = vmatmul.bf16.gmra.mxu0 %v310
  %v600 = vpop.f32.mrf.mxu0
  %v601 = vadd.f32 %v100, %v600
  %v602 = vpop.f32.mrf.mxu0
  %v603 = vadd.f32 %v100, %v602
  %604 = vmatmul.bf16.gmra.mxu0 %v312
  %v605 = vpop.f32.mrf.mxu0
  %v606 = vadd.f32 %v100, %v605
  %v607 = vpop.f32.mrf.mxu0
  %v608 = vadd.f32 %v100, %v607
  %609 = vmatmul.bf16.gmra.mxu0 %v314
  %v610 = vpop.f32.mrf.mxu0
  %v611 = vadd.f32 %v100, %v610
  %v612 = vpop.f32.mrf.mxu0
  %v613 = vadd.f32 %v100, %v612
  %614 = vmatmul.bf16.gmra.mxu0 %v316
  %v615 = vpop.f32.mrf.mxu0
  %v616 = vadd.f32 %v100, %v615
  %v617 = vpop.f32.mrf.mxu0
  %v618 = vadd.f32 %v100, %v617
  %619 = vmatmul.bf16.gmra.mxu0 %v318
  %v620 = vpop.f32.mrf.mxu0
  %v621 = vadd.f32 %v100, %v620
  %v622 = vpop.f32.mrf.mxu0
  %v623 = vadd.f32 %v100, %v622
  %624 = vmatmul.bf16.gmra.mxu0 %v320
  %v625 = vpop.f32.mrf.mxu0
  %v626 = vadd.f32 %v100, %v625
  %v627 = vpop.f32.mrf.mxu0
  %v628 = vadd.f32 %v100, %v627
  %629 = vmatmul.bf16.gmra.mxu0 %v322
  %v630 = vpop.f32.mrf.mxu0
  %v631 = vadd.f32 %v100, %v630
  %v632 = vpop.f32.mrf.mxu0
  %v633 = vadd.f32 %v100, %v632
  %634 = vmatmul.bf16.gmra.mxu0 %v324
  %v635 = vpop.f32.mrf.mxu0
  %v636 = vadd.f32 %v100, %v635
  %v637 = vpop.f32.mrf.mxu0
  %v638 = vadd.f32 %v100, %v637
  %639 = vmatmul.bf16.gmra.mxu0 %v326
  %v640 = vpop.f32.mrf.mxu0
  %v641 = vadd.f32 %v100, %v640
  %v642 = vpop.f32.mrf.mxu0
  %v643 = vadd.f32 %v100, %v642
  %644 = vmatmul.bf16.gmra.mxu0 %v328
  %v645 = vpop.f32.mrf.mxu0
  %v646 = vadd.f32 %v100, %v645
  %v647 = vpop.f32.mrf.mxu0
  %v648 = vadd.f32 %v100, %v647
  %649 = vmatmul.bf16.gmra.mxu0 %v330
  %v650 = vpop.f32.mrf.mxu0
  %v651 = vadd.f32 %v100, %v650
  %v652 = vpop.f32.mrf.mxu0
  %v653 = vadd.f32 %v100, %v652
  %654 = vmatmul.bf16.gmra.mxu0 %v332
  %v655 = vpop.f32.mrf.mxu0
  %v656 = vadd.f32 %v100, %v655
  %v657 = vpop.f32.mrf.mxu0
  %v658 = vadd.f32 %v100, %v657
  %659 = vmatmul.bf16.gmra.mxu0 %v334
  %v660 = vpop.f32.mrf.mxu0
  %v661 = vadd.f32 %v100, %v660
  %v662 = vpop.f32.mrf.mxu0
  %v663 = vadd.f32 %v100, %v662
  %664 = vmatmul.bf16.gmra.mxu0 %v336
  %v665 = vpop.f32.mrf.mxu0
  %v666 = vadd.f32 %v100, %v665
  %v667 = vpop.f32.mrf.mxu0
  %v668 = vadd.f32 %v100, %v667
  %669 = vmatmul.bf16.gmra.mxu0 %v338
  %v670 = vpop.f32.mrf.mxu0
  %v671 = vadd.f32 %v100, %v670
  %v672 = vpop.f32.mrf.mxu0
  %v673 = vadd.f32 %v100, %v672
  %674 = vmatmul.bf16.gmra.mxu0 %v340
  %v675 = vpop.f32.mrf.mxu0
  %v676 = vadd.f32 %v100, %v675
  %v677 = vpop.f32.mrf.mxu0
  %v678 = vadd.f32 %v100, %v677
  %679 = vmatmul.bf16.gmra.mxu0 %v342
  %v680 = vpop.f32.mrf.mxu0
  %v681 = vadd.f32 %v100, %v680
  %v682 = vpop.f32.mrf.mxu0
  %v683 = vadd.f32 %v100, %v682
  %684 = vmatmul.bf16.gmra.mxu0 %v344
  %v685 = vpop.f32.mrf.mxu0
  %v686 = vadd.f32 %v100, %v685
  %v687 = vpop.f32.mrf.mxu0
  %v688 = vadd.f32 %v100, %v687
  %689 = vmatmul.bf16.gmra.mxu0 %v346
  %v690 = vpop.f32.mrf.mxu0
  %v691 = vadd.f32 %v100, %v690
  %v692 = vpop.f32.mrf.mxu0
  %v693 = vadd.f32 %v100, %v692
  %694 = vmatmul.bf16.gmra.mxu0 %v348
  %v695 = vpop.f32.mrf.mxu0
  %v696 = vadd.f32 %v100, %v695
  %v697 = vpop.f32.mrf.mxu0
  %v698 = vadd.f32 %v100, %v697
  %699 = vmatmul.bf16.gmra.mxu0 %v350
  %v700 = vpop.f32.mrf.mxu0
  %v701 = vadd.f32 %v100, %v700
  %v702 = vpop.f32.mrf.mxu0
  %v703 = vadd.f32 %v100, %v702
  %704 = vmatmul.bf16.gmra.mxu0 %v352
  %v705 = vpop.f32.mrf.mxu0
  %v706 = vadd.f32 %v100, %v705
  %v707 = vpop.f32.mrf.mxu0
  %v708 = vadd.f32 %v100, %v707
  %709 = vmatmul.bf16.gmra.mxu0 %v354
  %v710 = vpop.f32.mrf.mxu0
  %v711 = vadd.f32 %v100, %v710
  %v712 = vpop.f32.mrf.mxu0
  %v713 = vadd.f32 %v100, %v712
  %714 = vmatmul.bf16.gmra.mxu0 %v356
  %v715 = vpop.f32.mrf.mxu0
  %v716 = vadd.f32 %v100, %v715
  %v717 = vpop.f32.mrf.mxu0
  %v718 = vadd.f32 %v100, %v717
  %719 = vdwg.mxu0
  %720 = vmatpush.bf16.msra.mxu0 0
  %721 = vmatpush.bf16.msra.mxu0 0
  %722 = vmatpush.bf16.msra.mxu0 0
  %723 = vmatpush.bf16.msra.mxu0 0
  %724 = vmatpush.bf16.msra.mxu0 0
  %725 = vmatpush.bf16.msra.mxu0 0
  %726 = vmatpush.bf16.msra.mxu0 %v549
  %727 = vmatpush.bf16.msra.mxu0 %v436
  %728 = vmatmul.bf16.gmra.mxu0 %v449
  %v729 = vpop.f32.mrf.mxu0
  %v730 = vadd.f32 %v561, %v729
  %v731 = vpop.f32.mrf.mxu0
  %v732 = vadd.f32 %v563, %v731
  %733 = vmatmul.bf16.gmra.mxu0 %v452
  %v734 = vpop.f32.mrf.mxu0
  %v735 = vadd.f32 %v566, %v734
  %v736 = vpop.f32.mrf.mxu0
  %v737 = vadd.f32 %v568, %v736
  %738 = vmatmul.bf16.gmra.mxu0 %v455
  %v739 = vpop.f32.mrf.mxu0
  %v740 = vadd.f32 %v571, %v739
  %v741 = vpop.f32.mrf.mxu0
  %v742 = vadd.f32 %v573, %v741
  %743 = vmatmul.bf16.gmra.mxu0 %v458
  %v744 = vpop.f32.mrf.mxu0
  %v745 = vadd.f32 %v576, %v744
  %v746 = vpop.f32.mrf.mxu0
  %v747 = vadd.f32 %v578, %v746
  %748 = vmatmul.bf16.gmra.mxu0 %v461
  %v749 = vpop.f32.mrf.mxu0
  %v750 = vadd.f32 %v581, %v749
  %v751 = vpop.f32.mrf.mxu0
  %v752 = vadd.f32 %v583, %v751
  %753 = vmatmul.bf16.gmra.mxu0 %v464
  %v754 = vpop.f32.mrf.mxu0
  %v755 = vadd.f32 %v586, %v754
  %v756 = vpop.f32.mrf.mxu0
  %v757 = vadd.f32 %v588, %v756
  %758 = vmatmul.bf16.gmra.mxu0 %v467
  %v759 = vpop.f32.mrf.mxu0
  %v760 = vadd.f32 %v591, %v759
  %v761 = vpop.f32.mrf.mxu0
  %v762 = vadd.f32 %v593, %v761
  %763 = vmatmul.bf16.gmra.mxu0 %v470
  %v764 = vpop.f32.mrf.mxu0
  %v765 = vadd.f32 %v596, %v764
  %v766 = vpop.f32.mrf.mxu0
  %v767 = vadd.f32 %v598, %v766
  %768 = vmatmul.bf16.gmra.mxu0 %v473
  %v769 = vpop.f32.mrf.mxu0
  %v770 = vadd.f32 %v601, %v769
  %v771 = vpop.f32.mrf.mxu0
  %v772 = vadd.f32 %v603, %v771
  %773 = vmatmul.bf16.gmra.mxu0 %v476
  %v774 = vpop.f32.mrf.mxu0
  %v775 = vadd.f32 %v606, %v774
  %v776 = vpop.f32.mrf.mxu0
  %v777 = vadd.f32 %v608, %v776
  %778 = vmatmul.bf16.gmra.mxu0 %v479
  %v779 = vpop.f32.mrf.mxu0
  %v780 = vadd.f32 %v611, %v779
  %v781 = vpop.f32.mrf.mxu0
  %v782 = vadd.f32 %v613, %v781
  %783 = vmatmul.bf16.gmra.mxu0 %v482
  %v784 = vpop.f32.mrf.mxu0
  %v785 = vadd.f32 %v616, %v784
  %v786 = vpop.f32.mrf.mxu0
  %v787 = vadd.f32 %v618, %v786
  %788 = vmatmul.bf16.gmra.mxu0 %v485
  %v789 = vpop.f32.mrf.mxu0
  %v790 = vadd.f32 %v621, %v789
  %v791 = vpop.f32.mrf.mxu0
  %v792 = vadd.f32 %v623, %v791
  %793 = vmatmul.bf16.gmra.mxu0 %v488
  %v794 = vpop.f32.mrf.mxu0
  %v795 = vadd.f32 %v626, %v794
  %v796 = vpop.f32.mrf.mxu0
  %v797 = vadd.f32 %v628, %v796
  %798 = vmatmul.bf16.gmra.mxu0 %v491
  %v799 = vpop.f32.mrf.mxu0
  %v800 = vadd.f32 %v631, %v799
  %v801 = vpop.f32.mrf.mxu0
  %v802 = vadd.f32 %v633, %v801
  %803 = vmatmul.bf16.gmra.mxu0 %v494
  %v804 = vpop.f32.mrf.mxu0
  %v805 = vadd.f32 %v636, %v804
  %v806 = vpop.f32.mrf.mxu0
  %v807 = vadd.f32 %v638, %v806
  %808 = vmatmul.bf16.gmra.mxu0 %v497
  %v809 = vpop.f32.mrf.mxu0
  %v810 = vadd.f32 %v641, %v809
  %v811 = vpop.f32.mrf.mxu0
  %v812 = vadd.f32 %v643, %v811
  %813 = vmatmul.bf16.gmra.mxu0 %v500
  %v814 = vpop.f32.mrf.mxu0
  %v815 = vadd.f32 %v646, %v814
  %v816 = vpop.f32.mrf.mxu0
  %v817 = vadd.f32 %v648, %v816
  %818 = vmatmul.bf16.gmra.mxu0 %v503
  %v819 = vpop.f32.mrf.mxu0
  %v820 = vadd.f32 %v651, %v819
  %v821 = vpop.f32.mrf.mxu0
  %v822 = vadd.f32 %v653, %v821
  %823 = vmatmul.bf16.gmra.mxu0 %v506
  %v824 = vpop.f32.mrf.mxu0
  %v825 = vadd.f32 %v656, %v824
  %v826 = vpop.f32.mrf.mxu0
  %v827 = vadd.f32 %v658, %v826
  %828 = vmatmul.bf16.gmra.mxu0 %v509
  %v829 = vpop.f32.mrf.mxu0
  %v830 = vadd.f32 %v661, %v829
  %v831 = vpop.f32.mrf.mxu0
  %v832 = vadd.f32 %v663, %v831
  %833 = vmatmul.bf16.gmra.mxu0 %v512
  %v834 = vpop.f32.mrf.mxu0
  %v835 = vadd.f32 %v666, %v834
  %v836 = vpop.f32.mrf.mxu0
  %v837 = vadd.f32 %v668, %v836
  %838 = vmatmul.bf16.gmra.mxu0 %v515
  %v839 = vpop.f32.mrf.mxu0
  %v840 = vadd.f32 %v671, %v839
  %v841 = vpop.f32.mrf.mxu0
  %v842 = vadd.f32 %v673, %v841
  %843 = vmatmul.bf16.gmra.mxu0 %v518
  %v844 = vpop.f32.mrf.mxu0
  %v845 = vadd.f32 %v676, %v844
  %v846 = vpop.f32.mrf.mxu0
  %v847 = vadd.f32 %v678, %v846
  %848 = vmatmul.bf16.gmra.mxu0 %v521
  %v849 = vpop.f32.mrf.mxu0
  %v850 = vadd.f32 %v681, %v849
  %v851 = vpop.f32.mrf.mxu0
  %v852 = vadd.f32 %v683, %v851
  %853 = vmatmul.bf16.gmra.mxu0 %v524
  %v854 = vpop.f32.mrf.mxu0
  %v855 = vadd.f32 %v686, %v854
  %v856 = vpop.f32.mrf.mxu0
  %v857 = vadd.f32 %v688, %v856
  %858 = vmatmul.bf16.gmra.mxu0 %v527
  %v859 = vpop.f32.mrf.mxu0
  %v860 = vadd.f32 %v691, %v859
  %v861 = vpop.f32.mrf.mxu0
  %v862 = vadd.f32 %v693, %v861
  %863 = vmatmul.bf16.gmra.mxu0 %v530
  %v864 = vpop.f32.mrf.mxu0
  %v865 = vadd.f32 %v696, %v864
  %v866 = vpop.f32.mrf.mxu0
  %v867 = vadd.f32 %v698, %v866
  %868 = vmatmul.bf16.gmra.mxu0 %v533
  %v869 = vpop.f32.mrf.mxu0
  %v870 = vadd.f32 %v701, %v869
  %v871 = vpop.f32.mrf.mxu0
  %v872 = vadd.f32 %v703, %v871
  %873 = vmatmul.bf16.gmra.mxu0 %v536
  %v874 = vpop.f32.mrf.mxu0
  %v875 = vadd.f32 %v706, %v874
  %v876 = vpop.f32.mrf.mxu0
  %v877 = vadd.f32 %v708, %v876
  %878 = vmatmul.bf16.gmra.mxu0 %v539
  %v879 = vpop.f32.mrf.mxu0
  %v880 = vadd.f32 %v711, %v879
  %v881 = vpop.f32.mrf.mxu0
  %v882 = vadd.f32 %v713, %v881
  %883 = vmatmul.bf16.gmra.mxu0 %v542
  %v884 = vpop.f32.mrf.mxu0
  %v885 = vadd.f32 %v716, %v884
  %v886 = vpop.f32.mrf.mxu0
  %v887 = vadd.f32 %v718, %v886
  %888 = vdwg.mxu0
  %v889 = vmax.f32 %v730, 0.0
  %v890 = vmax.f32 %v732, 0.0
  %v891 = vmax.f32 %v735, 0.0
  %v892 = vmax.f32 %v737, 0.0
  %v893 = vmax.f32 %v740, 0.0
  %v894 = vmax.f32 %v742, 0.0
  %v895 = vmax.f32 %v745, 0.0
  %v896 = vmax.f32 %v747, 0.0
  %v897 = vmax.f32 %v750, 0.0
  %v898 = vmax.f32 %v752, 0.0
  %v899 = vmax.f32 %v755, 0.0
  %v900 = vmax.f32 %v757, 0.0
  %v901 = vmax.f32 %v760, 0.0
  %v902 = vmax.f32 %v762, 0.0
  %v903 = vmax.f32 %v765, 0.0
  %v904 = vmax.f32 %v767, 0.0
  %v905 = vmax.f32 %v770, 0.0
  %v906 = vmax.f32 %v772, 0.0
  %v907 = vmax.f32 %v775, 0.0
  %v908 = vmax.f32 %v777, 0.0
  %v909 = vmax.f32 %v780, 0.0
  %v910 = vmax.f32 %v782, 0.0
  %v911 = vmax.f32 %v785, 0.0
  %v912 = vmax.f32 %v787, 0.0
  %v913 = vmax.f32 %v790, 0.0
  %v914 = vmax.f32 %v792, 0.0
  %v915 = vmax.f32 %v795, 0.0
  %v916 = vmax.f32 %v797, 0.0
  %v917 = vmax.f32 %v800, 0.0
  %v918 = vmax.f32 %v802, 0.0
  %v919 = vmax.f32 %v805, 0.0
  %v920 = vmax.f32 %v807, 0.0
  %v921 = vmax.f32 %v810, 0.0
  %v922 = vmax.f32 %v812, 0.0
  %v923 = vmax.f32 %v815, 0.0
  %v924 = vmax.f32 %v817, 0.0
  %v925 = vmax.f32 %v820, 0.0
  %v926 = vmax.f32 %v822, 0.0
  %v927 = vmax.f32 %v825, 0.0
  %v928 = vmax.f32 %v827, 0.0
  %v929 = vmax.f32 %v830, 0.0
  %v930 = vmax.f32 %v832, 0.0
  %v931 = vmax.f32 %v835, 0.0
  %v932 = vmax.f32 %v837, 0.0
  %v933 = vmax.f32 %v840, 0.0
  %v934 = vmax.f32 %v842, 0.0
  %v935 = vmax.f32 %v845, 0.0
  %v936 = vmax.f32 %v847, 0.0
  %v937 = vmax.f32 %v850, 0.0
  %v938 = vmax.f32 %v852, 0.0
  %v939 = vmax.f32 %v855, 0.0
  %v940 = vmax.f32 %v857, 0.0
  %v941 = vmax.f32 %v860, 0.0
  %v942 = vmax.f32 %v862, 0.0
  %v943 = vmax.f32 %v865, 0.0
  %v944 = vmax.f32 %v867, 0.0
  %v945 = vmax.f32 %v870, 0.0
  %v946 = vmax.f32 %v872, 0.0
  %v947 = vmax.f32 %v875, 0.0
  %v948 = vmax.f32 %v877, 0.0
  %v949 = vmax.f32 %v880, 0.0
  %v950 = vmax.f32 %v882, 0.0
  %v951 = vmax.f32 %v885, 0.0
  %v952 = vmax.f32 %v887, 0.0
  %v953 = vpack.c.bf16 %v889, %v889
  %v954 = vpack.c.bf16 %v890, %v890
  %v955 = vpack.c.bf16 %v891, %v891
  %v956 = vpack.c.bf16 %v892, %v892
  %v957 = vpack.c.bf16 %v893, %v893
  %v958 = vpack.c.bf16 %v894, %v894
  %v959 = vpack.c.bf16 %v895, %v895
  %v960 = vpack.c.bf16 %v896, %v896
  %v961 = vpack.c.bf16 %v897, %v897
  %v962 = vpack.c.bf16 %v898, %v898
  %v963 = vpack.c.bf16 %v899, %v899
  %v964 = vpack.c.bf16 %v900, %v900
  %v965 = vpack.c.bf16 %v901, %v901
  %v966 = vpack.c.bf16 %v902, %v902
  %v967 = vpack.c.bf16 %v903, %v903
  %v968 = vpack.c.bf16 %v904, %v904
  %v969 = vpack.c.bf16 %v905, %v905
  %v970 = vpack.c.bf16 %v906, %v906
  %v971 = vpack.c.bf16 %v907, %v907
  %v972 = vpack.c.bf16 %v908, %v908
  %v973 = vpack.c.bf16 %v909, %v909
  %v974 = vpack.c.bf16 %v910, %v910
  %v975 = vpack.c.bf16 %v911, %v911
  %v976 = vpack.c.bf16 %v912, %v912
  %v977 = vpack.c.bf16 %v913, %v913
  %v978 = vpack.c.bf16 %v914, %v914
  %v979 = vpack.c.bf16 %v915, %v915
  %v980 = vpack.c.bf16 %v916, %v916
  %v981 = vpack.c.bf16 %v917, %v917
  %v982 = vpack.c.bf16 %v918, %v918
  %v983 = vpack.c.bf16 %v919, %v919
  %v984 = vpack.c.bf16 %v920, %v920
  %v985 = vpack.c.bf16 %v921, %v921
  %v986 = vpack.c.bf16 %v922, %v922
  %v987 = vpack.c.bf16 %v923, %v923
  %v988 = vpack.c.bf16 %v924, %v924
  %v989 = vpack.c.bf16 %v925, %v925
  %v990 = vpack.c.bf16 %v926, %v926
  %v991 = vpack.c.bf16 %v927, %v927
  %v992 = vpack.c.bf16 %v928, %v928
  %v993 = vpack.c.bf16 %v929, %v929
  %v994 = vpack.c.bf16 %v930, %v930
  %v995 = vpack.c.bf16 %v931, %v931
  %v996 = vpack.c.bf16 %v932, %v932
  %v997 = vpack.c.bf16 %v933, %v933
  %v998 = vpack.c.bf16 %v934, %v934
  %v999 = vpack.c.bf16 %v935, %v935
  %v1000 = vpack.c.bf16 %v936, %v936
  %v1001 = vpack.c.bf16 %v937, %v937
  %v1002 = vpack.c.bf16 %v938, %v938
  %v1003 = vpack.c.bf16 %v939, %v939
  %v1004 = vpack.c.bf16 %v940, %v940
  %v1005 = vpack.c.bf16 %v941, %v941
  %v1006 = vpack.c.bf16 %v942, %v942
  %v1007 = vpack.c.bf16 %v943, %v943
  %v1008 = vpack.c.bf16 %v944, %v944
  %v1009 = vpack.c.bf16 %v945, %v945
  %v1010 = vpack.c.bf16 %v946, %v946
  %v1011 = vpack.c.bf16 %v947, %v947
  %v1012 = vpack.c.bf16 %v948, %v948
  %v1013 = vpack.c.bf16 %v949, %v949
  %v1014 = vpack.c.bf16 %v950, %v950
  %v1015 = vpack.c.bf16 %v951, %v951
  %v1016 = vpack.c.bf16 %v952, %v952
  %vm1017 = vcmask 519168
  %1018 = vst.msk [vmem:[%s3] sm:$0xf] %vm1017, %v953
  %1019 = vst.msk [vmem:[%s3 + $0x4] sm:$0xf] %vm1017, %v954
  %1020 = vst.msk [vmem:[%s3 + $0x8] sm:$0xf] %vm1017, %v955
  %1021 = vst.msk [vmem:[%s3 + $0xc] sm:$0xf] %vm1017, %v956
  %1022 = vst.msk [vmem:[%s3 + $0x10] sm:$0xf] %vm1017, %v957
  %1023 = vst.msk [vmem:[%s3 + $0x14] sm:$0xf] %vm1017, %v958
  %1024 = vst.msk [vmem:[%s3 + $0x18] sm:$0xf] %vm1017, %v959
  %1025 = vst.msk [vmem:[%s3 + $0x1c] sm:$0xf] %vm1017, %v960
  %1026 = vst.msk [vmem:[%s3 + $0x20] sm:$0xf] %vm1017, %v961
  %1027 = vst.msk [vmem:[%s3 + $0x24] sm:$0xf] %vm1017, %v962
  %1028 = vst.msk [vmem:[%s3 + $0x28] sm:$0xf] %vm1017, %v963
  %1029 = vst.msk [vmem:[%s3 + $0x2c] sm:$0xf] %vm1017, %v964
  %1030 = vst.msk [vmem:[%s3 + $0x30] sm:$0xf] %vm1017, %v965
  %1031 = vst.msk [vmem:[%s3 + $0x34] sm:$0xf] %vm1017, %v966
  %1032 = vst.msk [vmem:[%s3 + $0x38] sm:$0xf] %vm1017, %v967
  %1033 = vst.msk [vmem:[%s3 + $0x3c] sm:$0xf] %vm1017, %v968
  %1034 = vst.msk [vmem:[%s3 + $0x40] sm:$0xf] %vm1017, %v969
  %1035 = vst.msk [vmem:[%s3 + $0x44] sm:$0xf] %vm1017, %v970
  %1036 = vst.msk [vmem:[%s3 + $0x48] sm:$0xf] %vm1017, %v971
  %1037 = vst.msk [vmem:[%s3 + $0x4c] sm:$0xf] %vm1017, %v972
  %1038 = vst.msk [vmem:[%s3 + $0x50] sm:$0xf] %vm1017, %v973
  %1039 = vst.msk [vmem:[%s3 + $0x54] sm:$0xf] %vm1017, %v974
  %1040 = vst.msk [vmem:[%s3 + $0x58] sm:$0xf] %vm1017, %v975
  %1041 = vst.msk [vmem:[%s3 + $0x5c] sm:$0xf] %vm1017, %v976
  %1042 = vst.msk [vmem:[%s3 + $0x60] sm:$0xf] %vm1017, %v977
  %1043 = vst.msk [vmem:[%s3 + $0x64] sm:$0xf] %vm1017, %v978
  %1044 = vst.msk [vmem:[%s3 + $0x68] sm:$0xf] %vm1017, %v979
  %1045 = vst.msk [vmem:[%s3 + $0x6c] sm:$0xf] %vm1017, %v980
  %1046 = vst.msk [vmem:[%s3 + $0x70] sm:$0xf] %vm1017, %v981
  %1047 = vst.msk [vmem:[%s3 + $0x74] sm:$0xf] %vm1017, %v982
  %1048 = vst.msk [vmem:[%s3 + $0x78] sm:$0xf] %vm1017, %v983
  %1049 = vst.msk [vmem:[%s3 + $0x7c] sm:$0xf] %vm1017, %v984
  %1050 = vst.msk [vmem:[%s3 + $0x80] sm:$0xf] %vm1017, %v985
  %1051 = vst.msk [vmem:[%s3 + $0x84] sm:$0xf] %vm1017, %v986
  %1052 = vst.msk [vmem:[%s3 + $0x88] sm:$0xf] %vm1017, %v987
  %1053 = vst.msk [vmem:[%s3 + $0x8c] sm:$0xf] %vm1017, %v988
  %1054 = vst.msk [vmem:[%s3 + $0x90] sm:$0xf] %vm1017, %v989
  %1055 = vst.msk [vmem:[%s3 + $0x94] sm:$0xf] %vm1017, %v990
  %1056 = vst.msk [vmem:[%s3 + $0x98] sm:$0xf] %vm1017, %v991
  %1057 = vst.msk [vmem:[%s3 + $0x9c] sm:$0xf] %vm1017, %v992
  %1058 = vst.msk [vmem:[%s3 + $0xa0] sm:$0xf] %vm1017, %v993
  %1059 = vst.msk [vmem:[%s3 + $0xa4] sm:$0xf] %vm1017, %v994
  %1060 = vst.msk [vmem:[%s3 + $0xa8] sm:$0xf] %vm1017, %v995
  %1061 = vst.msk [vmem:[%s3 + $0xac] sm:$0xf] %vm1017, %v996
  %1062 = vst.msk [vmem:[%s3 + $0xb0] sm:$0xf] %vm1017, %v997
  %1063 = vst.msk [vmem:[%s3 + $0xb4] sm:$0xf] %vm1017, %v998
  %1064 = vst.msk [vmem:[%s3 + $0xb8] sm:$0xf] %vm1017, %v999
  %1065 = vst.msk [vmem:[%s3 + $0xbc] sm:$0xf] %vm1017, %v1000
  %1066 = vst.msk [vmem:[%s3 + $0xc0] sm:$0xf] %vm1017, %v1001
  %1067 = vst.msk [vmem:[%s3 + $0xc4] sm:$0xf] %vm1017, %v1002
  %1068 = vst.msk [vmem:[%s3 + $0xc8] sm:$0xf] %vm1017, %v1003
  %1069 = vst.msk [vmem:[%s3 + $0xcc] sm:$0xf] %vm1017, %v1004
  %1070 = vst.msk [vmem:[%s3 + $0xd0] sm:$0xf] %vm1017, %v1005
  %1071 = vst.msk [vmem:[%s3 + $0xd4] sm:$0xf] %vm1017, %v1006
  %1072 = vst.msk [vmem:[%s3 + $0xd8] sm:$0xf] %vm1017, %v1007
  %1073 = vst.msk [vmem:[%s3 + $0xdc] sm:$0xf] %vm1017, %v1008
  %1074 = vst.msk [vmem:[%s3 + $0xe0] sm:$0xf] %vm1017, %v1009
  %1075 = vst.msk [vmem:[%s3 + $0xe4] sm:$0xf] %vm1017, %v1010
  %1076 = vst.msk [vmem:[%s3 + $0xe8] sm:$0xf] %vm1017, %v1011
  %1077 = vst.msk [vmem:[%s3 + $0xec] sm:$0xf] %vm1017, %v1012
  %1078 = vst.msk [vmem:[%s3 + $0xf0] sm:$0xf] %vm1017, %v1013
  %1079 = vst.msk [vmem:[%s3 + $0xf4] sm:$0xf] %vm1017, %v1014
  %1080 = vst.msk [vmem:[%s3 + $0xf8] sm:$0xf] %vm1017, %v1015
  %1081 = vst.msk [vmem:[%s3 + $0xfc] sm:$0xf] %vm1017, %v1016
  // Predicated region
  $region14: #{tpu_custom_call.1} parent=0 // pred_check
    _
  $region15: #{tpu_custom_call.1} parent=0 // pred_check_branch
    %1083 = sbr.rel (0) target = $region17
  $region16: #{tpu_custom_call.1} parent=0 // pred_region
    _
  $region17: #{tpu_custom_call.1} parent=0 // pred_fallthru
    _
  // Predicated region
  $region18: #{tpu_custom_call.1} parent=0 // pred_check
    _
  $region19: #{tpu_custom_call.1} parent=0 // pred_check_branch
    %1085 = sbr.rel (0) target = $region21
  $region20: #{tpu_custom_call.1} parent=0 // pred_region
    _
  $region21: #{tpu_custom_call.1} parent=0 // pred_fallthru
    _

</llo_original>
